<compile_context>
chip_gen: v5e
topology: v5e:2x2
jax: 0.10.0
libtpu: 0.0.40
codegen_flags: <defaults>
</compile_context>

<pallas_src>
import functools

import jax
import jax.numpy as jnp
from jax.experimental import pallas as pl
from jax.experimental.pallas import tpu as pltpu


def _l2norm_kernel(alpha_ref, x_ref, o_ref, *, eps):
    # alpha_ref: SMEM (1,) scalar; x_ref / o_ref: VMEM blocks (1, C, tile_hw).
    x = x_ref[...].astype(jnp.float32)                     # (1, C, T)
    ss = jnp.sum(x * x, axis=1, keepdims=True)             # (1, 1, T) sublane reduce
    # Hoist alpha + reciprocal onto the per-column inverse (T elems, not C*T).
    # approx=False keeps exact 1/x so numerics track the PyTorch reference.
    inv = alpha_ref[0] * pl.reciprocal(jnp.sqrt(ss) + eps, approx=False)
    o_ref[...] = (x * inv).astype(o_ref.dtype)


def _pick_tile_hw(hw_padded, c, itemsize, max_tile=8192, vmem_budget=8 << 20):
    """Largest lane-dim tile (multiple of 128) dividing hw_padded, capped so
    2x(in+out) double-buffered blocks stay well under the v7x 32 MiB scoped
    VMEM default (and trivially within v6e/v5e budgets)."""
    cap = max(128, min(max_tile, (vmem_budget // (4 * c * itemsize)) // 128 * 128))
    if hw_padded <= cap:
        return hw_padded
    t = cap
    while hw_padded % t:
        t -= 128
    return t


def l2_normalization(x_nchw, alpha, *, eps=1e-6):
    """x_nchw: (B, C, H, W); alpha: (1,). Returns alpha * x / (||x||_2 over C + eps)."""
    B, C, H, W = x_nchw.shape
    HW = H * W
    # Free reshape: NCHW is already contiguous as (B, C, H*W) -> no HBM pass.
    x3d = x_nchw.reshape(B, C, HW)

    # Pad the spatial (lane) axis to a multiple of 128 so every block is
    # lane-dense. Padded zero columns produce zero outputs (0 * finite inv)
    # and are sliced off below.
    pad = (-HW) % 128
    if pad:
        x3d = jnp.pad(x3d, ((0, 0), (0, 0), (0, pad)))
    HWp = HW + pad

    tile_hw = _pick_tile_hw(HWp, C, x3d.dtype.itemsize)
    grid = (B, HWp // tile_hw)

    kernel = functools.partial(_l2norm_kernel, eps=eps)

    out3d = pl.pallas_call(
        kernel,
        out_shape=jax.ShapeDtypeStruct((B, C, HWp), x3d.dtype),
        grid_spec=pltpu.PrefetchScalarGridSpec(
            num_scalar_prefetch=0,
            grid=grid,
            in_specs=[
                pl.BlockSpec(memory_space=pltpu.SMEM),                  # alpha scalar
                pl.BlockSpec((1, C, tile_hw), lambda b, j: (b, 0, j)),  # x block
            ],
            out_specs=pl.BlockSpec((1, C, tile_hw), lambda b, j: (b, 0, j)),
        ),
        compiler_params=pltpu.CompilerParams(
            dimension_semantics=("parallel", "parallel"),
        ),
    )(alpha, x3d)

    if pad:
        out3d = out3d[:, :, :HW]
    return out3d.reshape(B, C, H, W)


if __name__ == "__main__":
    key = jax.random.PRNGKey(0)
    k_x, k_alpha = jax.random.split(key)

    B, C, H, W = 2, 4, 16, 16
    x = jax.random.normal(k_x, (B, C, H, W), dtype=jnp.float32)
    # nn.init.uniform_(alpha, 10.0, 20.0) — deterministic synthetic init.
    alpha = jax.random.uniform(k_alpha, (1,), minval=10.0, maxval=20.0,
                               dtype=jnp.float32)

    eps = 1e-6
    out = jax.block_until_ready(l2_normalization(x, alpha, eps=eps))

    # Pure-JAX reference (mirrors the PyTorch forward exactly).
    ref = alpha[0] * x / (jnp.sqrt(jnp.sum(x * x, axis=1, keepdims=True)) + eps)
    assert out.shape == (B, C, H, W)
    assert jnp.allclose(out, ref, atol=1e-5, rtol=1e-5)

    print("KERNEL_OK")
</pallas_src>

<mosaic_0001>
module attributes {stable_mosaic.version = 11 : i64} {
  func.func @_l2norm_kernel(%arg0: i32, %arg1: i32, %arg2: memref<1xf32, #tpu.memory_space<smem>>, %arg3: memref<1x4x256xf32, #tpu.memory_space<vmem>>, %arg4: memref<1x4x256xf32, #tpu.memory_space<vmem>>) attributes {dimension_semantics = [#tpu.dimension_semantics<parallel>, #tpu.dimension_semantics<parallel>], iteration_bounds = array<i64: 2, 1>, scalar_prefetch = 0 : i64, scratch_operands = 0 : i64, tpu.core_type = #tpu.core_type<tc>, window_params = [{transform_indices = @transform_0, window_bounds = array<i64: 1>}, {transform_indices = @transform_1, window_bounds = array<i64: 1, 4, 256>}, {transform_indices = @transform_2, window_bounds = array<i64: 1, 4, 256>}]} {
    %c0 = arith.constant 0 : index
    %c0_0 = arith.constant 0 : index
    %c0_1 = arith.constant 0 : index
    %0 = vector.load %arg3[%c0, %c0_0, %c0_1] : memref<1x4x256xf32, #tpu.memory_space<vmem>>, vector<1x4x256xf32>
    %1 = arith.mulf %0, %0 : vector<1x4x256xf32>
    %cst = arith.constant dense<0.000000e+00> : vector<1x256xf32>
    %2 = vector.multi_reduction <add>, %1, %cst [1] : vector<1x4x256xf32> to vector<1x256xf32>
    %3 = vector.shape_cast %2 : vector<1x256xf32> to vector<1x1x256xf32>
    %c0_2 = arith.constant 0 : index
    %4 = memref.load %arg2[%c0_2] : memref<1xf32, #tpu.memory_space<smem>>
    %5 = math.sqrt %3 : vector<1x1x256xf32>
    %cst_3 = arith.constant 9.99999997E-7 : f32
    %6 = vector.broadcast %cst_3 : f32 to vector<1x1x256xf32>
    %7 = arith.addf %5, %6 : vector<1x1x256xf32>
    %8 = tpu.reciprocal %7 : vector<1x1x256xf32> -> vector<1x1x256xf32>
    %9 = vector.broadcast %4 : f32 to vector<1x1x256xf32>
    %10 = arith.mulf %9, %8 : vector<1x1x256xf32>
    %11 = vector.broadcast %10 : vector<1x1x256xf32> to vector<1x4x256xf32>
    %12 = arith.mulf %0, %11 : vector<1x4x256xf32>
    %c0_4 = arith.constant 0 : index
    %c0_5 = arith.constant 0 : index
    %c0_6 = arith.constant 0 : index
    %13 = vector.load %arg4[%c0_4, %c0_5, %c0_6] : memref<1x4x256xf32, #tpu.memory_space<vmem>>, vector<1x4x256xf32>
    tpu.vector_store %arg4[%c0_4, %c0_5, %c0_6], %12 {strides = array<i32>} : memref<1x4x256xf32, #tpu.memory_space<vmem>>, vector<1x4x256xf32>,
    return
  }
  func.func @transform_0(%arg0: i32, %arg1: i32) -> i32 {
    %c0_i32 = arith.constant 0 : i32
    %c0_i32_0 = arith.constant 0 : i32
    return %c0_i32 : i32
  }
  func.func @transform_1(%arg0: i32, %arg1: i32) -> (i32, i32, i32) {
    %c0_i32 = arith.constant 0 : i32
    %c0_i32_0 = arith.constant 0 : i32
    return %arg0, %c0_i32, %arg1 : i32, i32, i32
  }
  func.func @transform_2(%arg0: i32, %arg1: i32) -> (i32, i32, i32) {
    %c0_i32 = arith.constant 0 : i32
    %c0_i32_0 = arith.constant 0 : i32
    return %arg0, %c0_i32, %arg1 : i32, i32, i32
  }
}

</mosaic_0001>

<llo_original>
// kernel: tpu_custom_call.1
$region0: #{tpu_custom_call.1}
  #allocation0 [shape = 'u32[]', space=smem, size = 0x4, offset = 0x4, fixed_abs, tag = 'smem constant byte address 0x4 - core index']
  #allocation1 [shape = 'u32[72,128]{1,0:T(1,128)}', space=vmem, size = 0x9000, scoped, tag = 'internal scratch']
  #allocation2 [shape = 'f32[1]{0:T(128)S(6)}', space=smem, size = 0x200, scoped, tag = 'scoped memory for tpu_custom_call.1']
  %s0 = inlined_call_operand.<no memory space> [shape: f32[1], index: 0, kind: input, shape index: {}]
  %s1 = inlined_call_operand.hbm [shape: f32[2,4,256], index: 1, kind: input, shape index: {}]
  %s2 = inlined_call_operand.hbm [shape: f32[2,4,256], index: 2, kind: output, shape index: {}]
  %s3 = sld [smem:[#allocation0]]
  $region45: #{tpu_custom_call.1} parent=0
    _
  %s5 = ssub.s32 1, %s3
  %s6 = scalar_select 0, %s5, %s3
  %7 = sst [smem:[#allocation2]] %s0
  $region1: #{tpu_custom_call.1} parent=0
    #allocation3 [shape = 'u8[8192]{0}', space=vmem, size = 0x2000, scoped, tag = 'input window, operand 1']
    #allocation4 [shape = 's32[2]{0}', space=sflag, size = 0x8, scoped, tag = 'scoped memory for tpu_custom_call.1']
    #allocation5 [shape = 's32[2]{0}', space=sflag, size = 0x8, scoped, tag = 'scoped memory for tpu_custom_call.1']
    #allocation6 [shape = 'u8[8192]{0}', space=vmem, size = 0x2000, scoped, tag = 'output window, operand 0']
    %8 = vsyncpa [#allocation4], 0
    %s9 = scalar_lea.sflag [#allocation4], 1
    %10 = vsyncpa %s9, 0
    %11 = vsyncpa [#allocation5], 0
    %s12 = scalar_lea.sflag [#allocation5], 1
    %13 = vsyncpa %s12, 0
    loop: start=0, step=1, limit=4
    $region2: #{tpu_custom_call.1} parent=1 // loop_pre_header
      _
    $region3: #{tpu_custom_call.1} parent=1 // loop_header
      %s15 = sphi 0, %s19
      %p16 = scmp.ge.s32.totalorder %s15, 4
      %s22 = sphi 0, %s34
      %s23 = sphi 0, %s30
      %s24 = sphi 0, %s22
      %s25 = sphi 0, %s23
      %s26 = sphi 0, %s24
      %s27 = sphi 0, %s25
      %s35 = sphi 0, %s35
      %s37 = sphi 0, %s35
      %s38 = sphi 0, %s37
      %s52 = sphi 0, %s38
      %s60 = sphi 0, %s62
      %s63 = sphi 0, %s60
      %s64 = sphi 0, %s63
      %s80 = sphi 0, %s64
      %s88 = sphi 0, %s90
      %s91 = sphi 0, %s88
      %s92 = sphi 0, %s91
      %s108 = sphi 0, %s92
    $region4: #{tpu_custom_call.1} parent=1 // loop_header_branch
      %18 = sbr.rel (%p16) target = $region8
    $region5: #{tpu_custom_call.1} parent=1 // loop_body
      %s20 = ssub.s32 %s15, 1
      %s21 = ssub.s32 %s15, 2
      %s28 = sadd.s32 1, %s23
      %p29 = scmp.ge.s32.totalorder %s28, 1
      %s30 = scalar_select %p29, 0, %s28
      %s31 = sadd.s32 1, %s22
      %s32 = scalar_select %p29, %s31, %s22
      %p33 = scmp.ge.s32.totalorder %s32, 2
      %s34 = scalar_select %p33, 0, %s32
      %s36 = sadd.s32 %s35, 1
      %p39 = scmp.eq.s32.totalorder %s15, 1
      %p40 = scmp.ne.s32.totalorder %s35, %s37
      %p41 = scmp.eq.s32.totalorder %s15, 0
      %p42 = por %p40, %p41
      %p43 = scmp.ne.s32.totalorder %s35, %s37
      %p44 = scmp.eq.s32.totalorder %s20, 1
      %p45 = por %p43, %p44
      %p46 = scmp.ne.s32.totalorder %s37, %s38
      %p47 = scmp.eq.s32.totalorder %s20, 0
      %p48 = por %p46, %p47
      %p49 = scmp.ne.s32.totalorder %s37, %s38
      %p50 = scmp.eq.s32.totalorder %s21, 1
      %p51 = por %p49, %p50
      %p53 = scmp.ne.s32.totalorder %s38, %s52
      %p54 = scmp.eq.s32.totalorder %s21, 0
      %p55 = por %p53, %p54
      %s56 = ssub.s32 %s22, %s34
      %s57 = ssub.s32 %s23, %s30
      %s58 = sor.u32 %s56, %s57
      %p59 = scmp.eq.s32.totalorder %s58, 0
      %s61 = sadd.s32 %s60, 1
      %s62 = scalar_select %p59, %s60, %s61
      %p65 = pneg %p59
      %p66 = scmp.eq.s32.totalorder %s15, 1
      %p67 = por %p65, %p66
      %p68 = scmp.ne.s32.totalorder %s60, %s63
      %p69 = scmp.eq.s32.totalorder %s15, 0
      %p70 = por %p68, %p69
      %p71 = scmp.ne.s32.totalorder %s60, %s63
      %p72 = scmp.eq.s32.totalorder %s20, 1
      %p73 = por %p71, %p72
      %p74 = scmp.ne.s32.totalorder %s63, %s64
      %p75 = scmp.eq.s32.totalorder %s20, 0
      %p76 = por %p74, %p75
      %p77 = scmp.ne.s32.totalorder %s63, %s64
      %p78 = scmp.eq.s32.totalorder %s21, 1
      %p79 = por %p77, %p78
      %p81 = scmp.ne.s32.totalorder %s64, %s80
      %p82 = scmp.eq.s32.totalorder %s21, 0
      %p83 = por %p81, %p82
      %s84 = ssub.s32 %s22, %s34
      %s85 = ssub.s32 %s23, %s30
      %s86 = sor.u32 %s84, %s85
      %p87 = scmp.eq.s32.totalorder %s86, 0
      %s89 = sadd.s32 %s88, 1
      %s90 = scalar_select %p87, %s88, %s89
      %p93 = pneg %p87
      %p94 = scmp.eq.s32.totalorder %s15, 1
      %p95 = por %p93, %p94
      %p96 = scmp.ne.s32.totalorder %s88, %s91
      %p97 = scmp.eq.s32.totalorder %s15, 0
      %p98 = por %p96, %p97
      %p99 = scmp.ne.s32.totalorder %s88, %s91
      %p100 = scmp.eq.s32.totalorder %s20, 1
      %p101 = por %p99, %p100
      %p102 = scmp.ne.s32.totalorder %s91, %s92
      %p103 = scmp.eq.s32.totalorder %s20, 0
      %p104 = por %p102, %p103
      %p105 = scmp.ne.s32.totalorder %s91, %s92
      %p106 = scmp.eq.s32.totalorder %s21, 1
      %p107 = por %p105, %p106
      %p109 = scmp.ne.s32.totalorder %s92, %s108
      %p110 = scmp.eq.s32.totalorder %s21, 0
      %p111 = por %p109, %p110
      %p112 = scmp.le.s32.totalorder 1, %s15
      %p113 = scmp.lt.s32.totalorder %s15, 3
      %p114 = pnand %p112, %p113
      %p115 = pneg %p114
      // Predicated region
      $region9: #{tpu_custom_call.1} parent=5 // pred_check
        _
      $region10: #{tpu_custom_call.1} parent=5 // pred_check_branch
        %117 = sbr.rel (%p114) target = $region12
      $region11: #{tpu_custom_call.1} parent=5 // pred_region
        %s118 = ssub.s32 %s15, 1
        // Predicated region
        $region13: #{tpu_custom_call.1} parent=11 // pred_check
          %p119 = pneg %p48
        $region14: #{tpu_custom_call.1} parent=11 // pred_check_branch
          %121 = sbr.rel (%p119) target = $region16
        $region15: #{tpu_custom_call.1} parent=11 // pred_region
          _
        $region16: #{tpu_custom_call.1} parent=11 // pred_fallthru
          _
      $region12: #{tpu_custom_call.1} parent=5 // pred_fallthru
        _
      %p122 = scmp.lt.s32.totalorder %s15, 2
      // Predicated region
      $region17: #{tpu_custom_call.1} parent=5 // pred_check
        %p123 = pneg %p122
      $region18: #{tpu_custom_call.1} parent=5 // pred_check_branch
        %125 = sbr.rel (%p123) target = $region20
      $region19: #{tpu_custom_call.1} parent=5 // pred_region
        // Predicated region
        $region21: #{tpu_custom_call.1} parent=19 // pred_check
          %p126 = pneg %p70
        $region22: #{tpu_custom_call.1} parent=19 // pred_check_branch
          %128 = sbr.rel (%p126) target = $region24
        $region23: #{tpu_custom_call.1} parent=19 // pred_region
          %s129 = sand.u32 %s60, 1
          %s130 = scalar_lea.sflag [#allocation4], %s129
          %s131 = sand.u32 %s60, 1
          %s132 = smul.addr %s131, 8
          %s133 = scalar_lea.vmem [#allocation3], %s132
          %s134 = smul.u32 2, %s23
          %136 = vsyncadd %s130, 0
          %s137 = smul.addr %s22, 2
          %s138 = sadd.s32 %s134, %s137
          %s139 = smul.addr %s138, 4
          %s140 = scalar_lea.hbm %s1, %s139
          %s142 = sshll.u32 %s140, 4
          %s143 = int_to_ptr.hbm [resolvable:$true] %s142
          %s144 = sshll.u32 %s133, 4
          %s145 = int_to_ptr.vmem [resolvable:$true] %s144
          %147 = dma.hbm_to_vmem [thread:$0]  %s143, 128, %s145, %s130
        $region24: #{tpu_custom_call.1} parent=19 // pred_fallthru
          _
      $region20: #{tpu_custom_call.1} parent=5 // pred_fallthru
        _
      %p148 = scmp.le.s32.totalorder 1, %s15
      %p149 = scmp.lt.s32.totalorder %s15, 3
      %p150 = pnand %p148, %p149
      %p151 = pneg %p150
      // Predicated region
      $region25: #{tpu_custom_call.1} parent=5 // pred_check
        _
      $region26: #{tpu_custom_call.1} parent=5 // pred_check_branch
        %153 = sbr.rel (%p150) target = $region28
      $region27: #{tpu_custom_call.1} parent=5 // pred_region
        %s154 = ssub.s32 %s15, 1
        %s155 = sand.u32 %s63, 1
        %s156 = scalar_lea.sflag [#allocation4], %s155
        %s157 = sand.u32 %s63, 1
        %s158 = smul.addr %s157, 8
        %s159 = scalar_lea.vmem [#allocation3], %s158
        // Predicated region
        $region29: #{tpu_custom_call.1} parent=27 // pred_check
          %p160 = pneg %p76
        $region30: #{tpu_custom_call.1} parent=27 // pred_check_branch
          %162 = sbr.rel (%p160) target = $region32
        $region31: #{tpu_custom_call.1} parent=27 // pred_region
          %164 = dma.done %s156, 128
        $region32: #{tpu_custom_call.1} parent=27 // pred_fallthru
          _
        %p165 = pneg %p48
        %p166 = pneg %p45
        %s167 = sand.u32 %s63, 1
        %s168 = scalar_lea.sflag [#allocation4], %s167
        %s169 = sand.u32 %s63, 1
        %s170 = smul.addr %s169, 8
        %s171 = scalar_lea.vmem [#allocation3], %s170
        %p172 = pneg %p76
        %p173 = pneg %p73
        %p174 = pneg %p104
        %p175 = pneg %p101
        %s176 = sand.u32 %s91, 1
        %s177 = scalar_lea.sflag [#allocation5], %s176
        %s178 = sand.u32 %s91, 1
        %s179 = smul.addr %s178, 8
        %s180 = scalar_lea.vmem [#allocation6], %s179
        %s181 = smul.u32 2, %s25
        %s182 = smul.u32 2, %s25
        %v183 = vld [vmem:[%s159] sm:$0xff]
        %v184 = vmul.f32 %v183, %v183
        %186 = vst [vmem:[#allocation1] ss:$2 sm:$0xff] %v184
        %v187 = vld.sshfl [vmem:[#allocation1] sm:$0xff pattern:$0x75316420]
        %v188 = vld.sshfl [vmem:[#allocation1 + $0x8] sm:$0xff pattern:$0x75316420]
        %vm191 = vcmask 1043456
        %v192 = vsel %vm191, %v187, 0.0
        %v193 = vrot.slane %v192, 4
        %v194 = vadd.f32 %v192, %v193
        %v195 = vrot.slane %v194, 2
        %v196 = vadd.f32 %v194, %v195
        %v197 = vrot.slane %v196, 1
        %v198 = vadd.f32 %v196, %v197
        %v199 = vsel %vm191, %v188, 0.0
        %v200 = vrot.slane %v199, 4
        %v201 = vadd.f32 %v199, %v200
        %v202 = vrot.slane %v201, 2
        %v203 = vadd.f32 %v201, %v202
        %v204 = vrot.slane %v203, 1
        %v205 = vadd.f32 %v203, %v204
        %s206 = sld [smem:[#allocation2]]
        %v207 = vrsqrt.pop %v198
        %v208 = vmul.f32 %v207, %v198
        %v209 = vmul.f32 %v208, %v207
        %v210 = vmul.f32 0.5, %v209
        %v211 = vsub.f32 1.5, %v210
        %v212 = vmul.f32 %v207, %v211
        %v213 = vmul.f32 %v198, %v212
        %vm214 = vcmp.eq.f32.partialorder %v198, inf
        %v215 = vsel %vm214, %v198, %v213
        %vm216 = vcmp.eq.f32.partialorder %v198, 0.0
        %v217 = vand.u32 %v198, 2147483648
        %v218 = vsel %vm216, %v217, %v215
        %v219 = vrsqrt.pop %v205
        %v220 = vmul.f32 %v219, %v205
        %v221 = vmul.f32 %v220, %v219
        %v222 = vmul.f32 0.5, %v221
        %v223 = vsub.f32 1.5, %v222
        %v224 = vmul.f32 %v219, %v223
        %v225 = vmul.f32 %v205, %v224
        %vm226 = vcmp.eq.f32.partialorder %v205, inf
        %v227 = vsel %vm226, %v205, %v225
        %vm228 = vcmp.eq.f32.partialorder %v205, 0.0
        %v229 = vand.u32 %v205, 2147483648
        %v230 = vsel %vm228, %v229, %v227
        %v231 = vadd.f32 %v218, 1e-06
        %v232 = vadd.f32 %v230, 1e-06
        %v233 = vrcp.pop %v231
        %v234 = vmul.f32 %v231, %v233
        %v235 = vsub.f32 1.0, %v234
        %v236 = vmul.f32 %v233, %v235
        %v237 = vadd.f32 %v233, %v236
        %vm238 = vweird.f32 %v231
        %vm239 = vweird.f32 %v233
        %vm240 = vmor %vm238, %vm239
        %v241 = vsel %vm240, %v233, %v237
        %v242 = vand.u32 2147483647, %v231
        %vm243 = vcmp.eq.f32.partialorder %v242, 8.507059e+37
        %v244 = vand.u32 %v231, 2147483648
        %v245 = vor.u32 1.1754944e-38, %v244
        %v246 = vsel %vm243, %v245, %v241
        %v247 = vrcp.pop %v232
        %v248 = vmul.f32 %v232, %v247
        %v249 = vsub.f32 1.0, %v248
        %v250 = vmul.f32 %v247, %v249
        %v251 = vadd.f32 %v247, %v250
        %vm252 = vweird.f32 %v232
        %vm253 = vweird.f32 %v247
        %vm254 = vmor %vm252, %vm253
        %v255 = vsel %vm254, %v247, %v251
        %v256 = vand.u32 2147483647, %v232
        %vm257 = vcmp.eq.f32.partialorder %v256, 8.507059e+37
        %v258 = vand.u32 %v232, 2147483648
        %v259 = vor.u32 1.1754944e-38, %v258
        %v260 = vsel %vm257, %v259, %v255
        %v261 = vstv %s206
        %v262 = vmul.f32 %v261, %v246
        %v263 = vmul.f32 %v261, %v260
        %v266 = vrot.slane %v263, 4
        %v267 = vsel %vm191, %v262, %v266
        %v269 = vmul.f32 %v183, %v267
        %270 = vst [vmem:[%s180] sm:$0xff] %v269
        %s271 = sand.u32 %s91, 1
        %s272 = scalar_lea.sflag [#allocation5], %s271
        %s273 = sand.u32 %s91, 1
        %s274 = smul.addr %s273, 8
        %s275 = scalar_lea.vmem [#allocation6], %s274
        // Predicated region
        $region33: #{tpu_custom_call.1} parent=27 // pred_check
          %p276 = pneg %p101
        $region34: #{tpu_custom_call.1} parent=27 // pred_check_branch
          %278 = sbr.rel (%p276) target = $region36
        $region35: #{tpu_custom_call.1} parent=27 // pred_region
          %s279 = smul.u32 2, %s25
          %281 = vsyncadd %s272, 0
          %s282 = smul.addr %s24, 2
          %s283 = sadd.s32 %s279, %s282
          %s284 = smul.addr %s283, 4
          %s285 = scalar_lea.hbm %s2, %s284
          %s287 = sshll.u32 %s275, 4
          %s288 = int_to_ptr.vmem [resolvable:$true] %s287
          %s289 = sshll.u32 %s285, 4
          %s290 = int_to_ptr.hbm [resolvable:$true] %s289
          %292 = dma.vmem_to_hbm [thread:$0]  %s288, 128, %s290, %s272
        $region36: #{tpu_custom_call.1} parent=27 // pred_fallthru
          _
      $region28: #{tpu_custom_call.1} parent=5 // pred_fallthru
        _
      %p293 = scmp.le.s32.totalorder 2, %s15
      // Predicated region
      $region37: #{tpu_custom_call.1} parent=5 // pred_check
        %p294 = pneg %p293
      $region38: #{tpu_custom_call.1} parent=5 // pred_check_branch
        %296 = sbr.rel (%p294) target = $region40
      $region39: #{tpu_custom_call.1} parent=5 // pred_region
        %s297 = ssub.s32 %s15, 2
        // Predicated region
        $region41: #{tpu_custom_call.1} parent=39 // pred_check
          %p298 = pneg %p107
        $region42: #{tpu_custom_call.1} parent=39 // pred_check_branch
          %300 = sbr.rel (%p298) target = $region44
        $region43: #{tpu_custom_call.1} parent=39 // pred_region
          %s301 = sand.u32 %s92, 1
          %s302 = scalar_lea.sflag [#allocation5], %s301
          %s303 = sand.u32 %s92, 1
          %s304 = smul.addr %s303, 8
          %s305 = scalar_lea.vmem [#allocation6], %s304
          %307 = dma.done %s302, 128
        $region44: #{tpu_custom_call.1} parent=39 // pred_fallthru
          _
      $region40: #{tpu_custom_call.1} parent=5 // pred_fallthru
        _
    $region6: #{tpu_custom_call.1} parent=1 // loop_footer
      %s19 = sadd.s32 1, %s15
    $region7: #{tpu_custom_call.1} parent=1 // loop_footer_branch
      %14 = sbr.rel target = $region3
    $region8: #{tpu_custom_call.1} parent=1 // loop_exit
      _
    %308 = vsyncpa [#allocation4], 1
    %s309 = scalar_lea.sflag [#allocation4], 1
    %310 = vsyncpa %s309, 1
    %311 = vsyncpa [#allocation5], 1
    %s312 = scalar_lea.sflag [#allocation5], 1
    %313 = vsyncpa %s312, 1

</llo_original>
